<compile_context>
chip_gen: v7x
topology: tpu7x:2x2x1
jax: 0.10.0
libtpu: 0.0.40
codegen_flags: <defaults>
</compile_context>

<pallas_src>
import math

import jax
import jax.numpy as jnp
from jax.experimental import pallas as pl
from jax.experimental.pallas import tpu as pltpu


# Below this many rows the fused XLA path beats a custom call (per review).
PALLAS_MIN_M = 16384
# 8192 rows -> ~17 MiB of double-buffered, lane-padded VMEM blocks; large
# enough that the ~0.35 us per-grid-step overhead is well amortized, small
# enough for v7x's 64 MiB physical / 32 MiB default-scoped VMEM.
MAX_TILE_M = 8192


def _linear_bias_relu_kernel(x_ref, wt_ref, bt_ref, o_ref):
    # x:  (TILE_M, K)  natural (row-major) layout, K == 3
    # wt: (K, N)       resident transposed weights
    # bt: (1, N)       bias + t1, resident
    # o:  (TILE_M, N)  written directly in the model's output layout
    x = x_ref[...]
    wt = wt_ref[...]
    y = bt_ref[...]                                  # (1, N) -> broadcasts over rows
    for ki in range(x_ref.shape[1]):                 # K == 3: three VPU FMAs, no MXU
        y = y + x[:, ki:ki + 1] * wt[ki:ki + 1, :]   # (TILE_M,1)*(1,N) -> (TILE_M,N)
    # Rows past the logical end of the (ragged) last block hold garbage; Pallas
    # drops out-of-bounds writes, so they never reach HBM.
    o_ref[...] = jnp.maximum(y, 0.0).astype(o_ref.dtype)


def model_forward(x1, t1, weight, bias, *, force_pallas=False):
    """relu(x1 @ weight.T + bias + t1); Linear applies over the last axis of x1."""
    x1 = jnp.asarray(x1, jnp.float32)
    t1 = jnp.asarray(t1, jnp.float32)
    weight = jnp.asarray(weight, jnp.float32)
    bias = jnp.asarray(bias, jnp.float32)

    lead = x1.shape[:-1]
    k = x1.shape[-1]
    n = weight.shape[0]
    m = int(math.prod(lead)) if lead else 1

    # Folding t1 into the bias is only valid when t1 broadcasts purely over the
    # channel axis (e.g. shape (8,) or (1, 8)).
    t1_foldable = t1.size == n

    if (m < PALLAS_MIN_M and not force_pallas) or not t1_foldable:
        # Small problems / general t1 broadcasting: let XLA fuse
        # matmul + add + relu in one pass.
        y = jnp.einsum("...k,nk->...n", x1, weight,
                       precision=jax.lax.Precision.HIGHEST) + bias + t1
        return jnp.maximum(y, 0.0)

    # Free reshapes only -- no HBM copies in the wrapper.
    x2d = x1.reshape(m, k)                                    # (M, K)
    wt = jnp.transpose(weight)                                # (K, N), 24 floats
    bt = (bias + t1.reshape(-1)).reshape(1, n)                # (1, N)

    # Second-to-last block dim must be a multiple of 8; Pallas masks the ragged
    # last block itself (no jnp.pad).
    tile_m = min(MAX_TILE_M, max(8, pl.cdiv(m, 8) * 8))
    grid_m = pl.cdiv(m, tile_m)

    out = pl.pallas_call(
        _linear_bias_relu_kernel,
        out_shape=jax.ShapeDtypeStruct((m, n), jnp.float32),
        grid=(grid_m,),
        in_specs=[
            pl.BlockSpec((tile_m, k), lambda i: (i, 0)),      # x tile, natural layout
            pl.BlockSpec((k, n), lambda i: (0, 0)),           # weights resident
            pl.BlockSpec((1, n), lambda i: (0, 0)),           # bias + t1 resident
        ],
        out_specs=pl.BlockSpec((tile_m, n), lambda i: (i, 0)),
        compiler_params=pltpu.CompilerParams(
            dimension_semantics=("parallel",),                # megacore on v7x
            vmem_limit_bytes=32 * 1024 * 1024,                # covers v5e's 16 MiB default
        ),
        cost_estimate=pl.CostEstimate(
            flops=2 * m * k * n,
            transcendentals=0,
            bytes_accessed=4 * (m * k + m * n + k * n + n),
        ),
    )(x2d, wt, bt)

    return out.reshape(lead + (n,))


def _reference(x, t1, weight, bias):
    # Exact f32 reference (elementwise + reduce; no MXU precision ambiguity).
    y = jnp.sum(x[..., None, :] * weight, axis=-1) + bias + t1
    return jnp.maximum(y, 0.0)


if __name__ == "__main__":
    key = jax.random.PRNGKey(0)
    kx, kt, kw, kb, kx2 = jax.random.split(key, 5)

    # Small shapes consistent with Linear(3, 8): channels-last so the Linear
    # applies over the final dim.
    x1 = jax.random.normal(kx, (2, 8, 8, 3), dtype=jnp.float32)
    t1 = jax.random.normal(kt, (1, 8), dtype=jnp.float32)

    # Deterministic parameters (nn.Linear(3, 8): weight (8, 3), bias (8,)).
    bound = 1.0 / math.sqrt(3.0)
    weight = jax.random.uniform(kw, (8, 3), minval=-bound, maxval=bound,
                                dtype=jnp.float32)
    bias = jax.random.uniform(kb, (8,), minval=-bound, maxval=bound,
                              dtype=jnp.float32)

    # 1) Force the Pallas path at demo size so the kernel itself is exercised.
    out = jax.block_until_ready(
        model_forward(x1, t1, weight, bias, force_pallas=True))
    assert out.shape == (2, 8, 8, 8)
    assert jnp.allclose(out, _reference(x1, t1, weight, bias),
                        atol=1e-5, rtol=1e-5)

    # 2) Ragged M (39 rows, not a multiple of 8): exercises Pallas' masked
    #    handling of the partial last block.
    x2 = jax.random.normal(kx2, (3, 13, 3), dtype=jnp.float32)
    out2 = jax.block_until_ready(
        model_forward(x2, t1, weight, bias, force_pallas=True))
    assert out2.shape == (3, 13, 8)
    assert jnp.allclose(out2, _reference(x2, t1, weight, bias),
                        atol=1e-5, rtol=1e-5)

    print("KERNEL_OK")
</pallas_src>

<mosaic_0001>
module attributes {stable_mosaic.version = 11 : i64} {
  func.func @_linear_bias_relu_kernel(%arg0: i32, %arg1: memref<128x3xf32, #tpu.memory_space<vmem>>, %arg2: memref<3x8xf32, #tpu.memory_space<vmem>>, %arg3: memref<1x8xf32, #tpu.memory_space<vmem>>, %arg4: memref<128x8xf32, #tpu.memory_space<vmem>>) attributes {dimension_semantics = [#tpu.dimension_semantics<parallel>], iteration_bounds = array<i64: 1>, scalar_prefetch = 0 : i64, scratch_operands = 0 : i64, tpu.core_type = #tpu.core_type<tc>, window_params = [{transform_indices = @transform_0, window_bounds = array<i64: 128, 3>}, {pipeline_mode = #tpu.pipeline_mode<synchronous>, transform_indices = @transform_1, window_bounds = array<i64: 3, 8>}, {pipeline_mode = #tpu.pipeline_mode<synchronous>, transform_indices = @transform_2, window_bounds = array<i64: 1, 8>}, {transform_indices = @transform_3, window_bounds = array<i64: 128, 8>}]} {
    %c0 = arith.constant 0 : index
    %c0_0 = arith.constant 0 : index
    %0 = vector.load %arg1[%c0, %c0_0] : memref<128x3xf32, #tpu.memory_space<vmem>>, vector<128x3xf32>
    %c0_1 = arith.constant 0 : index
    %c0_2 = arith.constant 0 : index
    %1 = vector.load %arg2[%c0_1, %c0_2] : memref<3x8xf32, #tpu.memory_space<vmem>>, vector<3x8xf32>
    %c0_3 = arith.constant 0 : index
    %c0_4 = arith.constant 0 : index
    %2 = vector.load %arg3[%c0_3, %c0_4] : memref<1x8xf32, #tpu.memory_space<vmem>>, vector<1x8xf32>
    %3 = vector.extract_strided_slice %0 {offsets = [0, 0], sizes = [128, 1], strides = [1, 1]} : vector<128x3xf32> to vector<128x1xf32>
    %4 = vector.extract_strided_slice %1 {offsets = [0, 0], sizes = [1, 8], strides = [1, 1]} : vector<3x8xf32> to vector<1x8xf32>
    %5 = vector.broadcast %3 : vector<128x1xf32> to vector<128x8xf32>
    %6 = vector.broadcast %4 : vector<1x8xf32> to vector<128x8xf32>
    %7 = arith.mulf %5, %6 : vector<128x8xf32>
    %8 = vector.broadcast %2 : vector<1x8xf32> to vector<128x8xf32>
    %9 = arith.addf %8, %7 : vector<128x8xf32>
    %10 = vector.extract_strided_slice %0 {offsets = [0, 1], sizes = [128, 1], strides = [1, 1]} : vector<128x3xf32> to vector<128x1xf32>
    %11 = vector.extract_strided_slice %1 {offsets = [1, 0], sizes = [1, 8], strides = [1, 1]} : vector<3x8xf32> to vector<1x8xf32>
    %12 = vector.broadcast %10 : vector<128x1xf32> to vector<128x8xf32>
    %13 = vector.broadcast %11 : vector<1x8xf32> to vector<128x8xf32>
    %14 = arith.mulf %12, %13 : vector<128x8xf32>
    %15 = arith.addf %9, %14 : vector<128x8xf32>
    %16 = vector.extract_strided_slice %0 {offsets = [0, 2], sizes = [128, 1], strides = [1, 1]} : vector<128x3xf32> to vector<128x1xf32>
    %17 = vector.extract_strided_slice %1 {offsets = [2, 0], sizes = [1, 8], strides = [1, 1]} : vector<3x8xf32> to vector<1x8xf32>
    %18 = vector.broadcast %16 : vector<128x1xf32> to vector<128x8xf32>
    %19 = vector.broadcast %17 : vector<1x8xf32> to vector<128x8xf32>
    %20 = arith.mulf %18, %19 : vector<128x8xf32>
    %21 = arith.addf %15, %20 : vector<128x8xf32>
    %cst = arith.constant 0.000000e+00 : f32
    %22 = vector.broadcast %cst : f32 to vector<128x8xf32>
    %23 = arith.maximumf %21, %22 : vector<128x8xf32>
    %c0_5 = arith.constant 0 : index
    %c0_6 = arith.constant 0 : index
    %24 = vector.load %arg4[%c0_5, %c0_6] : memref<128x8xf32, #tpu.memory_space<vmem>>, vector<128x8xf32>
    tpu.vector_store %arg4[%c0_5, %c0_6], %23 {strides = array<i32>} : memref<128x8xf32, #tpu.memory_space<vmem>>, vector<128x8xf32>,
    return
  }
  func.func @transform_0(%arg0: i32) -> (i32, i32) {
    %c0_i32 = arith.constant 0 : i32
    %c0_i32_0 = arith.constant 0 : i32
    return %arg0, %c0_i32 : i32, i32
  }
  func.func @transform_1(%arg0: i32) -> (i32, i32) {
    %c0_i32 = arith.constant 0 : i32
    %c0_i32_0 = arith.constant 0 : i32
    %c0_i32_1 = arith.constant 0 : i32
    return %c0_i32, %c0_i32_0 : i32, i32
  }
  func.func @transform_2(%arg0: i32) -> (i32, i32) {
    %c0_i32 = arith.constant 0 : i32
    %c0_i32_0 = arith.constant 0 : i32
    %c0_i32_1 = arith.constant 0 : i32
    return %c0_i32, %c0_i32_0 : i32, i32
  }
  func.func @transform_3(%arg0: i32) -> (i32, i32) {
    %c0_i32 = arith.constant 0 : i32
    %c0_i32_0 = arith.constant 0 : i32
    return %arg0, %c0_i32 : i32, i32
  }
}

</mosaic_0001>

<llo_original>
// kernel: tpu_custom_call.1
$region0: #{tpu_custom_call.1}
  #allocation0 [shape = 'u32[]', space=smem, size = 0x4, offset = 0x4, fixed_abs, tag = 'smem constant byte address 0x4 - core index']
  #allocation1 [shape = 'u32[144,128]{1,0:T(1,128)}', space=vmem, size = 0x12000, scoped, tag = 'internal scratch']
  %s0 = inlined_call_operand.vmem [shape: f32[128,3], index: 0, kind: input, shape index: {}]
  %s1 = inlined_call_operand.vmem [shape: f32[3,8], index: 1, kind: input, shape index: {}]
  %s2 = inlined_call_operand.vmem [shape: f32[1,8], index: 2, kind: input, shape index: {}]
  %s3 = inlined_call_operand.vmem [shape: f32[128,8], index: 3, kind: output, shape index: {}]
  %s4 = sld [smem:[#allocation0]]
  $region22: #{tpu_custom_call.1} parent=0
    _
  %s6 = ssub.s32 1, %s4
  %s7 = scalar_select 0, %s6, %s4
  // Predicated region
  $region2: #{tpu_custom_call.1} parent=0 // pred_check
    _
  $region3: #{tpu_custom_call.1} parent=0 // pred_check_branch
    %9 = sbr.rel (0) target = $region5
  $region4: #{tpu_custom_call.1} parent=0 // pred_region
    _
  $region5: #{tpu_custom_call.1} parent=0 // pred_fallthru
    _
  // Predicated region
  $region6: #{tpu_custom_call.1} parent=0 // pred_check
    _
  $region7: #{tpu_custom_call.1} parent=0 // pred_check_branch
    %11 = sbr.rel (0) target = $region9
  $region8: #{tpu_custom_call.1} parent=0 // pred_region
    _
  $region9: #{tpu_custom_call.1} parent=0 // pred_fallthru
    _
  // Predicated region
  $region10: #{tpu_custom_call.1} parent=0 // pred_check
    _
  $region11: #{tpu_custom_call.1} parent=0 // pred_check_branch
    %13 = sbr.rel (0) target = $region13
  $region12: #{tpu_custom_call.1} parent=0 // pred_region
    _
  $region13: #{tpu_custom_call.1} parent=0 // pred_fallthru
    _
  %v14 = vld [vmem:[%s0] sm:$0xff]
  %v15 = vld [vmem:[%s0 + $0x8] sm:$0xff]
  %v16 = vld [vmem:[%s0 + $0x10] sm:$0xff]
  %v17 = vld [vmem:[%s0 + $0x18] sm:$0xff]
  %v18 = vld [vmem:[%s0 + $0x20] sm:$0xff]
  %v19 = vld [vmem:[%s0 + $0x28] sm:$0xff]
  %v20 = vld [vmem:[%s0 + $0x30] sm:$0xff]
  %v21 = vld [vmem:[%s0 + $0x38] sm:$0xff]
  %v22 = vld [vmem:[%s0 + $0x40] sm:$0xff]
  %v23 = vld [vmem:[%s0 + $0x48] sm:$0xff]
  %v24 = vld [vmem:[%s0 + $0x50] sm:$0xff]
  %v25 = vld [vmem:[%s0 + $0x58] sm:$0xff]
  %v26 = vld [vmem:[%s0 + $0x60] sm:$0xff]
  %v27 = vld [vmem:[%s0 + $0x68] sm:$0xff]
  %v28 = vld [vmem:[%s0 + $0x70] sm:$0xff]
  %v29 = vld [vmem:[%s0 + $0x78] sm:$0xff]
  %v30 = vld [vmem:[%s1] sm:$0x7]
  %v31 = vld [vmem:[%s2] sm:$0x1]
  %33 = vset.pattern.permute.xlu0 0
  %34 = vperm.xlu0 %33, %v14
  %v35 = vpop.permute.xlu0 %34
  %38 = vset.pattern.permute.xlu0 0
  %39 = vperm.xlu0 %38, %v15
  %v40 = vpop.permute.xlu0 %39
  %43 = vset.pattern.permute.xlu0 0
  %44 = vperm.xlu0 %43, %v16
  %v45 = vpop.permute.xlu0 %44
  %48 = vset.pattern.permute.xlu0 0
  %49 = vperm.xlu0 %48, %v17
  %v50 = vpop.permute.xlu0 %49
  %53 = vset.pattern.permute.xlu0 0
  %54 = vperm.xlu0 %53, %v18
  %v55 = vpop.permute.xlu0 %54
  %58 = vset.pattern.permute.xlu0 0
  %59 = vperm.xlu0 %58, %v19
  %v60 = vpop.permute.xlu0 %59
  %63 = vset.pattern.permute.xlu0 0
  %64 = vperm.xlu0 %63, %v20
  %v65 = vpop.permute.xlu0 %64
  %68 = vset.pattern.permute.xlu0 0
  %69 = vperm.xlu0 %68, %v21
  %v70 = vpop.permute.xlu0 %69
  %73 = vset.pattern.permute.xlu0 0
  %74 = vperm.xlu0 %73, %v22
  %v75 = vpop.permute.xlu0 %74
  %78 = vset.pattern.permute.xlu0 0
  %79 = vperm.xlu0 %78, %v23
  %v80 = vpop.permute.xlu0 %79
  %83 = vset.pattern.permute.xlu0 0
  %84 = vperm.xlu0 %83, %v24
  %v85 = vpop.permute.xlu0 %84
  %88 = vset.pattern.permute.xlu0 0
  %89 = vperm.xlu0 %88, %v25
  %v90 = vpop.permute.xlu0 %89
  %93 = vset.pattern.permute.xlu0 0
  %94 = vperm.xlu0 %93, %v26
  %v95 = vpop.permute.xlu0 %94
  %98 = vset.pattern.permute.xlu0 0
  %99 = vperm.xlu0 %98, %v27
  %v100 = vpop.permute.xlu0 %99
  %103 = vset.pattern.permute.xlu0 0
  %104 = vperm.xlu0 %103, %v28
  %v105 = vpop.permute.xlu0 %104
  %108 = vset.pattern.permute.xlu0 0
  %109 = vperm.xlu0 %108, %v29
  %v110 = vpop.permute.xlu0 %109
  %v112 = vlaneseq
  %v113 = vshrl.u32 %v112, 7
  %v114 = vsub.s32 0, %v113
  %v115 = vrot.slane %v30, %v114
  %v116 = vmul.f32 %v35, %v115
  %v117 = vmul.f32 %v40, %v115
  %v118 = vmul.f32 %v45, %v115
  %v119 = vmul.f32 %v50, %v115
  %v120 = vmul.f32 %v55, %v115
  %v121 = vmul.f32 %v60, %v115
  %v122 = vmul.f32 %v65, %v115
  %v123 = vmul.f32 %v70, %v115
  %v124 = vmul.f32 %v75, %v115
  %v125 = vmul.f32 %v80, %v115
  %v126 = vmul.f32 %v85, %v115
  %v127 = vmul.f32 %v90, %v115
  %v128 = vmul.f32 %v95, %v115
  %v129 = vmul.f32 %v100, %v115
  %v130 = vmul.f32 %v105, %v115
  %v131 = vmul.f32 %v110, %v115
  %v133 = vlaneseq
  %v134 = vshrl.u32 %v133, 7
  %v135 = vsub.s32 0, %v134
  %v136 = vrot.slane %v31, %v135
  %v138 = vadd.f32 %v136, %v116
  %v139 = vadd.f32 %v136, %v117
  %v140 = vadd.f32 %v136, %v118
  %v141 = vadd.f32 %v136, %v119
  %v142 = vadd.f32 %v136, %v120
  %v143 = vadd.f32 %v136, %v121
  %v144 = vadd.f32 %v136, %v122
  %v145 = vadd.f32 %v136, %v123
  %v146 = vadd.f32 %v136, %v124
  %v147 = vadd.f32 %v136, %v125
  %v148 = vadd.f32 %v136, %v126
  %v149 = vadd.f32 %v136, %v127
  %v150 = vadd.f32 %v136, %v128
  %v151 = vadd.f32 %v136, %v129
  %v152 = vadd.f32 %v136, %v130
  %v153 = vadd.f32 %v136, %v131
  %154 = vset.pattern.permute.xlu0 1
  %155 = vperm.xlu0 %154, %v14
  %v156 = vpop.permute.xlu0 %155
  %158 = vset.pattern.permute.xlu0 1
  %159 = vperm.xlu0 %158, %v15
  %v160 = vpop.permute.xlu0 %159
  %162 = vset.pattern.permute.xlu0 1
  %163 = vperm.xlu0 %162, %v16
  %v164 = vpop.permute.xlu0 %163
  %166 = vset.pattern.permute.xlu0 1
  %167 = vperm.xlu0 %166, %v17
  %v168 = vpop.permute.xlu0 %167
  %170 = vset.pattern.permute.xlu0 1
  %171 = vperm.xlu0 %170, %v18
  %v172 = vpop.permute.xlu0 %171
  %174 = vset.pattern.permute.xlu0 1
  %175 = vperm.xlu0 %174, %v19
  %v176 = vpop.permute.xlu0 %175
  %178 = vset.pattern.permute.xlu0 1
  %179 = vperm.xlu0 %178, %v20
  %v180 = vpop.permute.xlu0 %179
  %182 = vset.pattern.permute.xlu0 1
  %183 = vperm.xlu0 %182, %v21
  %v184 = vpop.permute.xlu0 %183
  %186 = vset.pattern.permute.xlu0 1
  %187 = vperm.xlu0 %186, %v22
  %v188 = vpop.permute.xlu0 %187
  %190 = vset.pattern.permute.xlu0 1
  %191 = vperm.xlu0 %190, %v23
  %v192 = vpop.permute.xlu0 %191
  %194 = vset.pattern.permute.xlu0 1
  %195 = vperm.xlu0 %194, %v24
  %v196 = vpop.permute.xlu0 %195
  %198 = vset.pattern.permute.xlu0 1
  %199 = vperm.xlu0 %198, %v25
  %v200 = vpop.permute.xlu0 %199
  %202 = vset.pattern.permute.xlu0 1
  %203 = vperm.xlu0 %202, %v26
  %v204 = vpop.permute.xlu0 %203
  %206 = vset.pattern.permute.xlu0 1
  %207 = vperm.xlu0 %206, %v27
  %v208 = vpop.permute.xlu0 %207
  %210 = vset.pattern.permute.xlu0 1
  %211 = vperm.xlu0 %210, %v28
  %v212 = vpop.permute.xlu0 %211
  %214 = vset.pattern.permute.xlu0 1
  %215 = vperm.xlu0 %214, %v29
  %v216 = vpop.permute.xlu0 %215
  %v218 = vlaneseq
  %v219 = vshrl.u32 %v218, 7
  %v220 = vsub.s32 1, %v219
  %v221 = vrot.slane %v30, %v220
  %v222 = vmul.f32 %v156, %v221
  %v223 = vmul.f32 %v160, %v221
  %v224 = vmul.f32 %v164, %v221
  %v225 = vmul.f32 %v168, %v221
  %v226 = vmul.f32 %v172, %v221
  %v227 = vmul.f32 %v176, %v221
  %v228 = vmul.f32 %v180, %v221
  %v229 = vmul.f32 %v184, %v221
  %v230 = vmul.f32 %v188, %v221
  %v231 = vmul.f32 %v192, %v221
  %v232 = vmul.f32 %v196, %v221
  %v233 = vmul.f32 %v200, %v221
  %v234 = vmul.f32 %v204, %v221
  %v235 = vmul.f32 %v208, %v221
  %v236 = vmul.f32 %v212, %v221
  %v237 = vmul.f32 %v216, %v221
  %v238 = vadd.f32 %v138, %v222
  %v239 = vadd.f32 %v139, %v223
  %v240 = vadd.f32 %v140, %v224
  %v241 = vadd.f32 %v141, %v225
  %v242 = vadd.f32 %v142, %v226
  %v243 = vadd.f32 %v143, %v227
  %v244 = vadd.f32 %v144, %v228
  %v245 = vadd.f32 %v145, %v229
  %v246 = vadd.f32 %v146, %v230
  %v247 = vadd.f32 %v147, %v231
  %v248 = vadd.f32 %v148, %v232
  %v249 = vadd.f32 %v149, %v233
  %v250 = vadd.f32 %v150, %v234
  %v251 = vadd.f32 %v151, %v235
  %v252 = vadd.f32 %v152, %v236
  %v253 = vadd.f32 %v153, %v237
  %254 = vset.pattern.permute.xlu0 2
  %255 = vperm.xlu0 %254, %v14
  %v256 = vpop.permute.xlu0 %255
  %258 = vset.pattern.permute.xlu0 2
  %259 = vperm.xlu0 %258, %v15
  %v260 = vpop.permute.xlu0 %259
  %262 = vset.pattern.permute.xlu0 2
  %263 = vperm.xlu0 %262, %v16
  %v264 = vpop.permute.xlu0 %263
  %266 = vset.pattern.permute.xlu0 2
  %267 = vperm.xlu0 %266, %v17
  %v268 = vpop.permute.xlu0 %267
  %270 = vset.pattern.permute.xlu0 2
  %271 = vperm.xlu0 %270, %v18
  %v272 = vpop.permute.xlu0 %271
  %274 = vset.pattern.permute.xlu0 2
  %275 = vperm.xlu0 %274, %v19
  %v276 = vpop.permute.xlu0 %275
  %278 = vset.pattern.permute.xlu0 2
  %279 = vperm.xlu0 %278, %v20
  %v280 = vpop.permute.xlu0 %279
  %282 = vset.pattern.permute.xlu0 2
  %283 = vperm.xlu0 %282, %v21
  %v284 = vpop.permute.xlu0 %283
  %286 = vset.pattern.permute.xlu0 2
  %287 = vperm.xlu0 %286, %v22
  %v288 = vpop.permute.xlu0 %287
  %290 = vset.pattern.permute.xlu0 2
  %291 = vperm.xlu0 %290, %v23
  %v292 = vpop.permute.xlu0 %291
  %294 = vset.pattern.permute.xlu0 2
  %295 = vperm.xlu0 %294, %v24
  %v296 = vpop.permute.xlu0 %295
  %298 = vset.pattern.permute.xlu0 2
  %299 = vperm.xlu0 %298, %v25
  %v300 = vpop.permute.xlu0 %299
  %302 = vset.pattern.permute.xlu0 2
  %303 = vperm.xlu0 %302, %v26
  %v304 = vpop.permute.xlu0 %303
  %306 = vset.pattern.permute.xlu0 2
  %307 = vperm.xlu0 %306, %v27
  %v308 = vpop.permute.xlu0 %307
  %310 = vset.pattern.permute.xlu0 2
  %311 = vperm.xlu0 %310, %v28
  %v312 = vpop.permute.xlu0 %311
  %314 = vset.pattern.permute.xlu0 2
  %315 = vperm.xlu0 %314, %v29
  %v316 = vpop.permute.xlu0 %315
  %v318 = vlaneseq
  %v319 = vshrl.u32 %v318, 7
  %v320 = vsub.s32 2, %v319
  %v321 = vrot.slane %v30, %v320
  %v322 = vmul.f32 %v256, %v321
  %v323 = vmul.f32 %v260, %v321
  %v324 = vmul.f32 %v264, %v321
  %v325 = vmul.f32 %v268, %v321
  %v326 = vmul.f32 %v272, %v321
  %v327 = vmul.f32 %v276, %v321
  %v328 = vmul.f32 %v280, %v321
  %v329 = vmul.f32 %v284, %v321
  %v330 = vmul.f32 %v288, %v321
  %v331 = vmul.f32 %v292, %v321
  %v332 = vmul.f32 %v296, %v321
  %v333 = vmul.f32 %v300, %v321
  %v334 = vmul.f32 %v304, %v321
  %v335 = vmul.f32 %v308, %v321
  %v336 = vmul.f32 %v312, %v321
  %v337 = vmul.f32 %v316, %v321
  %v338 = vadd.f32 %v238, %v322
  %v339 = vadd.f32 %v239, %v323
  %v340 = vadd.f32 %v240, %v324
  %v341 = vadd.f32 %v241, %v325
  %v342 = vadd.f32 %v242, %v326
  %v343 = vadd.f32 %v243, %v327
  %v344 = vadd.f32 %v244, %v328
  %v345 = vadd.f32 %v245, %v329
  %v346 = vadd.f32 %v246, %v330
  %v347 = vadd.f32 %v247, %v331
  %v348 = vadd.f32 %v248, %v332
  %v349 = vadd.f32 %v249, %v333
  %v350 = vadd.f32 %v250, %v334
  %v351 = vadd.f32 %v251, %v335
  %v352 = vadd.f32 %v252, %v336
  %v353 = vadd.f32 %v253, %v337
  %v354 = vmax.f32 %v338, 0.0
  %v355 = vmax.f32 %v339, 0.0
  %v356 = vmax.f32 %v340, 0.0
  %v357 = vmax.f32 %v341, 0.0
  %v358 = vmax.f32 %v342, 0.0
  %v359 = vmax.f32 %v343, 0.0
  %v360 = vmax.f32 %v344, 0.0
  %v361 = vmax.f32 %v345, 0.0
  %v362 = vmax.f32 %v346, 0.0
  %v363 = vmax.f32 %v347, 0.0
  %v364 = vmax.f32 %v348, 0.0
  %v365 = vmax.f32 %v349, 0.0
  %v366 = vmax.f32 %v350, 0.0
  %v367 = vmax.f32 %v351, 0.0
  %v368 = vmax.f32 %v352, 0.0
  %v369 = vmax.f32 %v353, 0.0
  %vm370 = vcmask 64512
  %371 = vst.msk [vmem:[%s3] sm:$0xff] %vm370, %v354
  %372 = vst.msk [vmem:[%s3 + $0x8] sm:$0xff] %vm370, %v355
  %373 = vst.msk [vmem:[%s3 + $0x10] sm:$0xff] %vm370, %v356
  %374 = vst.msk [vmem:[%s3 + $0x18] sm:$0xff] %vm370, %v357
  %375 = vst.msk [vmem:[%s3 + $0x20] sm:$0xff] %vm370, %v358
  %376 = vst.msk [vmem:[%s3 + $0x28] sm:$0xff] %vm370, %v359
  %377 = vst.msk [vmem:[%s3 + $0x30] sm:$0xff] %vm370, %v360
  %378 = vst.msk [vmem:[%s3 + $0x38] sm:$0xff] %vm370, %v361
  %379 = vst.msk [vmem:[%s3 + $0x40] sm:$0xff] %vm370, %v362
  %380 = vst.msk [vmem:[%s3 + $0x48] sm:$0xff] %vm370, %v363
  %381 = vst.msk [vmem:[%s3 + $0x50] sm:$0xff] %vm370, %v364
  %382 = vst.msk [vmem:[%s3 + $0x58] sm:$0xff] %vm370, %v365
  %383 = vst.msk [vmem:[%s3 + $0x60] sm:$0xff] %vm370, %v366
  %384 = vst.msk [vmem:[%s3 + $0x68] sm:$0xff] %vm370, %v367
  %385 = vst.msk [vmem:[%s3 + $0x70] sm:$0xff] %vm370, %v368
  %386 = vst.msk [vmem:[%s3 + $0x78] sm:$0xff] %vm370, %v369
  // Predicated region
  $region14: #{tpu_custom_call.1} parent=0 // pred_check
    _
  $region15: #{tpu_custom_call.1} parent=0 // pred_check_branch
    %388 = sbr.rel (0) target = $region17
  $region16: #{tpu_custom_call.1} parent=0 // pred_region
    _
  $region17: #{tpu_custom_call.1} parent=0 // pred_fallthru
    _
  // Predicated region
  $region18: #{tpu_custom_call.1} parent=0 // pred_check
    _
  $region19: #{tpu_custom_call.1} parent=0 // pred_check_branch
    %390 = sbr.rel (0) target = $region21
  $region20: #{tpu_custom_call.1} parent=0 // pred_region
    _
  $region21: #{tpu_custom_call.1} parent=0 // pred_fallthru
    _

</llo_original>
